<compile_context>
chip_gen: v6e
topology: v6e:2x2x1
jax: 0.10.0
libtpu: 0.0.40
codegen_flags: <defaults>
</compile_context>

<pallas_src>
import jax
import jax.numpy as jnp
from jax.experimental import pallas as pl
from jax.experimental.pallas import tpu as pltpu


def feedforward_kernel(x_ref, w1_ref, b1_ref, w2_ref, b2_ref, o_ref):
    # x_ref : (TB, IN)      -- batch tile
    # w1_ref: (HID, IN)     -- fc1 weight, torch layout, resident in VMEM
    # b1_ref: (HID, 1)      -- fc1 bias (column)
    # w2_ref: (HID, 1)      -- fc2 weight (column)
    # b2_ref: (1,)          -- fc2 bias, SMEM scalar
    # o_ref : (1, 1, TB)    -- lane-dense output slab (batch on the lane axis)
    x = x_ref[...].astype(jnp.bfloat16)
    w1 = w1_ref[...].astype(jnp.bfloat16)

    # fc1 on the MXU with batch on the output lane axis: (HID, IN) x (TB, IN)^T
    h = jax.lax.dot_general(
        w1, x, (((1,), (1,)), ((), ())),
        preferred_element_type=jnp.float32)            # (HID, TB), f32 accum
    h = jnp.maximum(h + b1_ref[...], 0.0)              # bias + ReLU (VPU)

    # fc2 (N=1): VPU multiply + sublane reduction (XLU) -- no wasted MXU pass.
    out = jnp.sum(h * w2_ref[...], axis=0, keepdims=True)   # (1, TB)
    out = out + b2_ref[0]

    # Sigmoid (exp lands on the EUP slot).
    o_ref[...] = (1.0 / (1.0 + jnp.exp(-out)))[None].astype(o_ref.dtype)


def feedforward(x, w1, b1, w2, b2, *, block_b=512):
    """x: (B, input_size); w1: (hidden, input_size); b1: (hidden,);
    w2: (1, hidden); b2: (1,). Same parameter shapes as torch.nn.Linear."""
    B, in_sz = x.shape
    hid = w1.shape[0]

    # Lane-dense batch tile: multiple of 128, at most block_b rows.
    TB = min(block_b, 128 * pl.cdiv(B, 128))
    n_tiles = pl.cdiv(B, TB)
    B_pad = n_tiles * TB
    if B_pad != B:
        x = jnp.pad(x, ((0, B_pad - B), (0, 0)))

    # Cheap vector reshapes only (no full W1 transpose in the wrapper).
    b1_c = b1.reshape(hid, 1)
    w2_c = w2.reshape(hid, 1)
    b2_s = b2.reshape(1)

    # VMEM budget: double-buffered x/out tiles + resident params + intermediates
    # + headroom; capped well under the v7x 64 MiB physical VMEM.
    est = (2 * TB * in_sz * 4 + 2 * TB * 4
           + (hid * in_sz + 2 * hid) * 4 + 2 * hid * TB * 4 + (8 << 20))
    vmem_limit = min(32 << 20, max(16 << 20, est))

    out = pl.pallas_call(
        feedforward_kernel,
        out_shape=jax.ShapeDtypeStruct((n_tiles, 1, TB), x.dtype),
        grid=(n_tiles,),
        in_specs=[
            pl.BlockSpec((TB, in_sz), lambda i: (i, 0)),        # x: pipelined
            pl.BlockSpec((hid, in_sz), lambda i: (0, 0)),       # W1: resident
            pl.BlockSpec((hid, 1), lambda i: (0, 0)),           # b1: resident
            pl.BlockSpec((hid, 1), lambda i: (0, 0)),           # w2: resident
            pl.BlockSpec(memory_space=pltpu.MemorySpace.SMEM),  # b2: scalar
        ],
        out_specs=pl.BlockSpec((1, 1, TB), lambda i: (i, 0, 0)),
        compiler_params=pltpu.CompilerParams(
            dimension_semantics=("parallel",),
            vmem_limit_bytes=vmem_limit),
    )(x, w1, b1_c, w2_c, b2_s)

    return out.reshape(B_pad, 1)[:B]


if __name__ == "__main__":
    input_size = 16
    hidden_size = 32
    batch = 8

    key = jax.random.PRNGKey(0)
    kx, kw1, kb1, kw2, kb2 = jax.random.split(key, 5)

    x = jax.random.normal(kx, (batch, input_size), dtype=jnp.float32)

    # Deterministic parameter init (uniform, roughly like torch Linear default).
    bound1 = 1.0 / (input_size ** 0.5)
    w1 = jax.random.uniform(kw1, (hidden_size, input_size), jnp.float32, -bound1, bound1)
    b1 = jax.random.uniform(kb1, (hidden_size,), jnp.float32, -bound1, bound1)
    bound2 = 1.0 / (hidden_size ** 0.5)
    w2 = jax.random.uniform(kw2, (1, hidden_size), jnp.float32, -bound2, bound2)
    b2 = jax.random.uniform(kb2, (1,), jnp.float32, -bound2, bound2)

    out = feedforward(x, w1, b1, w2, b2)
    jax.block_until_ready(out)
    assert out.shape == (batch, 1)

    # Reference with the same bf16 MXU operands / f32 accumulation as the kernel.
    h_ref = jnp.dot(x.astype(jnp.bfloat16), w1.T.astype(jnp.bfloat16),
                    preferred_element_type=jnp.float32) + b1
    ref_bf16 = jax.nn.sigmoid(jnp.maximum(h_ref, 0.0) @ w2.T + b2)
    assert jnp.allclose(out, ref_bf16, atol=1e-5, rtol=1e-5)

    # Sanity check against pure-f32 module semantics (looser tolerance because
    # the fc1 operands are bf16 on the MXU).
    ref_f32 = jax.nn.sigmoid(jnp.maximum(x @ w1.T + b1, 0.0) @ w2.T + b2)
    assert jnp.allclose(out, ref_f32, atol=2e-2, rtol=2e-2)

    print("KERNEL_OK")
</pallas_src>

<mosaic_0001>
module attributes {stable_mosaic.version = 11 : i64} {
  func.func @feedforward_kernel(%arg0: i32, %arg1: memref<128x16xf32, #tpu.memory_space<vmem>>, %arg2: memref<32x16xf32, #tpu.memory_space<vmem>>, %arg3: memref<32x1xf32, #tpu.memory_space<vmem>>, %arg4: memref<32x1xf32, #tpu.memory_space<vmem>>, %arg5: memref<1xf32, #tpu.memory_space<smem>>, %arg6: memref<1x1x128xf32, #tpu.memory_space<vmem>>) attributes {dimension_semantics = [#tpu.dimension_semantics<parallel>], iteration_bounds = array<i64: 1>, scalar_prefetch = 0 : i64, scratch_operands = 0 : i64, tpu.core_type = #tpu.core_type<tc>, window_params = [{transform_indices = @transform_0, window_bounds = array<i64: 128, 16>}, {pipeline_mode = #tpu.pipeline_mode<synchronous>, transform_indices = @transform_1, window_bounds = array<i64: 32, 16>}, {pipeline_mode = #tpu.pipeline_mode<synchronous>, transform_indices = @transform_2, window_bounds = array<i64: 32, 1>}, {pipeline_mode = #tpu.pipeline_mode<synchronous>, transform_indices = @transform_3, window_bounds = array<i64: 32, 1>}, {transform_indices = @transform_4, window_bounds = array<i64: 1>}, {transform_indices = @transform_5, window_bounds = array<i64: 1, 1, 128>}]} {
    %c0 = arith.constant 0 : index
    %c0_0 = arith.constant 0 : index
    %0 = vector.load %arg1[%c0, %c0_0] : memref<128x16xf32, #tpu.memory_space<vmem>>, vector<128x16xf32>
    %1 = arith.truncf %0 : vector<128x16xf32> to vector<128x16xbf16>
    %c0_1 = arith.constant 0 : index
    %c0_2 = arith.constant 0 : index
    %2 = vector.load %arg2[%c0_1, %c0_2] : memref<32x16xf32, #tpu.memory_space<vmem>>, vector<32x16xf32>
    %3 = arith.truncf %2 : vector<32x16xf32> to vector<32x16xbf16>
    %cst = arith.constant dense<0.000000e+00> : vector<32x128xf32>
    %4 = tpu.matmul %3, %1, %cst {dimension_numbers = #tpu.dot_dimension_numbers<[1], [1], [0], [0], [0, 0, 1, 0], [], []>} : vector<32x16xbf16>, vector<128x16xbf16>, vector<32x128xf32> -> vector<32x128xf32>
    %c0_3 = arith.constant 0 : index
    %c0_4 = arith.constant 0 : index
    %5 = vector.load %arg3[%c0_3, %c0_4] : memref<32x1xf32, #tpu.memory_space<vmem>>, vector<32x1xf32>
    %6 = vector.broadcast %5 : vector<32x1xf32> to vector<32x128xf32>
    %7 = arith.addf %4, %6 : vector<32x128xf32>
    %cst_5 = arith.constant 0.000000e+00 : f32
    %8 = vector.broadcast %cst_5 : f32 to vector<32x128xf32>
    %9 = arith.maximumf %7, %8 : vector<32x128xf32>
    %c0_6 = arith.constant 0 : index
    %c0_7 = arith.constant 0 : index
    %10 = vector.load %arg4[%c0_6, %c0_7] : memref<32x1xf32, #tpu.memory_space<vmem>>, vector<32x1xf32>
    %11 = vector.broadcast %10 : vector<32x1xf32> to vector<32x128xf32>
    %12 = arith.mulf %9, %11 : vector<32x128xf32>
    %cst_8 = arith.constant dense<0.000000e+00> : vector<128xf32>
    %13 = vector.multi_reduction <add>, %12, %cst_8 [0] : vector<32x128xf32> to vector<128xf32>
    %14 = vector.shape_cast %13 : vector<128xf32> to vector<1x128xf32>
    %c0_9 = arith.constant 0 : index
    %15 = memref.load %arg5[%c0_9] : memref<1xf32, #tpu.memory_space<smem>>
    %16 = vector.broadcast %15 : f32 to vector<1x128xf32>
    %17 = arith.addf %14, %16 : vector<1x128xf32>
    %cst_10 = arith.constant 0.000000e+00 : f32
    %18 = vector.broadcast %cst_10 : f32 to vector<1x128xf32>
    %19 = arith.subf %18, %17 : vector<1x128xf32>
    %20 = math.exp %19 : vector<1x128xf32>
    %cst_11 = arith.constant 1.000000e+00 : f32
    %21 = vector.broadcast %cst_11 : f32 to vector<1x128xf32>
    %22 = arith.addf %21, %20 : vector<1x128xf32>
    %cst_12 = arith.constant 1.000000e+00 : f32
    %23 = vector.broadcast %cst_12 : f32 to vector<1x128xf32>
    %24 = arith.divf %23, %22 : vector<1x128xf32>
    %25 = vector.shape_cast %24 : vector<1x128xf32> to vector<1x1x128xf32>
    %c0_13 = arith.constant 0 : index
    %c0_14 = arith.constant 0 : index
    %c0_15 = arith.constant 0 : index
    %26 = vector.load %arg6[%c0_13, %c0_14, %c0_15] : memref<1x1x128xf32, #tpu.memory_space<vmem>>, vector<1x1x128xf32>
    tpu.vector_store %arg6[%c0_13, %c0_14, %c0_15], %25 {strides = array<i32>} : memref<1x1x128xf32, #tpu.memory_space<vmem>>, vector<1x1x128xf32>,
    return
  }
  func.func @transform_0(%arg0: i32) -> (i32, i32) {
    %c0_i32 = arith.constant 0 : i32
    %c0_i32_0 = arith.constant 0 : i32
    return %arg0, %c0_i32 : i32, i32
  }
  func.func @transform_1(%arg0: i32) -> (i32, i32) {
    %c0_i32 = arith.constant 0 : i32
    %c0_i32_0 = arith.constant 0 : i32
    %c0_i32_1 = arith.constant 0 : i32
    return %c0_i32, %c0_i32_0 : i32, i32
  }
  func.func @transform_2(%arg0: i32) -> (i32, i32) {
    %c0_i32 = arith.constant 0 : i32
    %c0_i32_0 = arith.constant 0 : i32
    %c0_i32_1 = arith.constant 0 : i32
    return %c0_i32, %c0_i32_0 : i32, i32
  }
  func.func @transform_3(%arg0: i32) -> (i32, i32) {
    %c0_i32 = arith.constant 0 : i32
    %c0_i32_0 = arith.constant 0 : i32
    %c0_i32_1 = arith.constant 0 : i32
    return %c0_i32, %c0_i32_0 : i32, i32
  }
  func.func @transform_4(%arg0: i32) -> i32 {
    %c0_i32 = arith.constant 0 : i32
    %c0_i32_0 = arith.constant 0 : i32
    return %c0_i32 : i32
  }
  func.func @transform_5(%arg0: i32) -> (i32, i32, i32) {
    %c0_i32 = arith.constant 0 : i32
    %c0_i32_0 = arith.constant 0 : i32
    %c0_i32_1 = arith.constant 0 : i32
    return %arg0, %c0_i32, %c0_i32_0 : i32, i32, i32
  }
}

</mosaic_0001>

<llo_original>
// kernel: tpu_custom_call.1
$region0: #{tpu_custom_call.1}
  #allocation0 [shape = 'u32[]', space=smem, size = 0x4, offset = 0x4, fixed_abs, tag = 'smem constant byte address 0x4 - core index']
  #allocation1 [shape = 'u32[144,128]{1,0:T(1,128)}', space=vmem, size = 0x12000, scoped, tag = 'internal scratch']
  #allocation2 [shape = 'f32[1]{0:T(128)S(6)}', space=smem, size = 0x200, scoped, tag = 'scoped memory for tpu_custom_call.1']
  %s0 = inlined_call_operand.vmem [shape: f32[128,16], index: 0, kind: input, shape index: {}]
  %s1 = inlined_call_operand.vmem [shape: f32[32,16], index: 1, kind: input, shape index: {}]
  %s2 = inlined_call_operand.vmem [shape: f32[32,1], index: 2, kind: input, shape index: {}]
  %s3 = inlined_call_operand.vmem [shape: f32[32,1], index: 3, kind: input, shape index: {}]
  %s4 = inlined_call_operand.<no memory space> [shape: f32[1], index: 4, kind: input, shape index: {}]
  %s5 = inlined_call_operand.hbm [shape: f32[1,1,128], index: 5, kind: output, shape index: {}]
  %s6 = sld [smem:[#allocation0]]
  $region30: #{tpu_custom_call.1} parent=0
    _
  %s8 = ssub.s32 1, %s6
  %s9 = scalar_select 0, %s8, %s6
  %10 = sst [smem:[#allocation2]] %s4
  $region1: #{tpu_custom_call.1} parent=0
    #allocation3 [shape = 'u8[512]{0}', space=vmem, size = 0x400, scoped, tag = 'output window, operand 0, single buffered']
    #allocation4 [shape = 's32[1]{0}', space=sflag, size = 0x4, scoped, tag = 'scoped memory for tpu_custom_call.1']
    %11 = vsyncpa [#allocation4], 0
    // Predicated region
    $region2: #{tpu_custom_call.1} parent=1 // pred_check
      _
    $region3: #{tpu_custom_call.1} parent=1 // pred_check_branch
      %13 = sbr.rel (0) target = $region5
    $region4: #{tpu_custom_call.1} parent=1 // pred_region
      _
    $region5: #{tpu_custom_call.1} parent=1 // pred_fallthru
      _
    // Predicated region
    $region6: #{tpu_custom_call.1} parent=1 // pred_check
      _
    $region7: #{tpu_custom_call.1} parent=1 // pred_check_branch
      %15 = sbr.rel (0) target = $region9
    $region8: #{tpu_custom_call.1} parent=1 // pred_region
      _
    $region9: #{tpu_custom_call.1} parent=1 // pred_fallthru
      _
    // Predicated region
    $region10: #{tpu_custom_call.1} parent=1 // pred_check
      _
    $region11: #{tpu_custom_call.1} parent=1 // pred_check_branch
      %17 = sbr.rel (0) target = $region13
    $region12: #{tpu_custom_call.1} parent=1 // pred_region
      _
    $region13: #{tpu_custom_call.1} parent=1 // pred_fallthru
      _
    // Predicated region
    $region14: #{tpu_custom_call.1} parent=1 // pred_check
      _
    $region15: #{tpu_custom_call.1} parent=1 // pred_check_branch
      %19 = sbr.rel (0) target = $region17
    $region16: #{tpu_custom_call.1} parent=1 // pred_region
      _
    $region17: #{tpu_custom_call.1} parent=1 // pred_fallthru
      _
    // Predicated region
    $region18: #{tpu_custom_call.1} parent=1 // pred_check
      _
    $region19: #{tpu_custom_call.1} parent=1 // pred_check_branch
      %21 = sbr.rel (0) target = $region21
    $region20: #{tpu_custom_call.1} parent=1 // pred_region
      _
    $region21: #{tpu_custom_call.1} parent=1 // pred_fallthru
      _
    %v23 = vld [vmem:[%s0] sm:$0xff]
    %v24 = vld [vmem:[%s0 + $0x8] sm:$0xff]
    %v25 = vld [vmem:[%s0 + $0x10] sm:$0xff]
    %v26 = vld [vmem:[%s0 + $0x18] sm:$0xff]
    %v27 = vld [vmem:[%s0 + $0x20] sm:$0xff]
    %v28 = vld [vmem:[%s0 + $0x28] sm:$0xff]
    %v29 = vld [vmem:[%s0 + $0x30] sm:$0xff]
    %v30 = vld [vmem:[%s0 + $0x38] sm:$0xff]
    %v31 = vld [vmem:[%s0 + $0x40] sm:$0xff]
    %v32 = vld [vmem:[%s0 + $0x48] sm:$0xff]
    %v33 = vld [vmem:[%s0 + $0x50] sm:$0xff]
    %v34 = vld [vmem:[%s0 + $0x58] sm:$0xff]
    %v35 = vld [vmem:[%s0 + $0x60] sm:$0xff]
    %v36 = vld [vmem:[%s0 + $0x68] sm:$0xff]
    %v37 = vld [vmem:[%s0 + $0x70] sm:$0xff]
    %v38 = vld [vmem:[%s0 + $0x78] sm:$0xff]
    %v39 = vpack.c.bf16 %v24, %v23
    %v40 = vpack.c.bf16 %v26, %v25
    %v41 = vpack.c.bf16 %v28, %v27
    %v42 = vpack.c.bf16 %v30, %v29
    %v43 = vpack.c.bf16 %v32, %v31
    %v44 = vpack.c.bf16 %v34, %v33
    %v45 = vpack.c.bf16 %v36, %v35
    %v46 = vpack.c.bf16 %v38, %v37
    %v47 = vld [vmem:[%s1] sm:$0xff]
    %v48 = vld [vmem:[%s1 + $0x8] sm:$0xff]
    %v49 = vld [vmem:[%s1 + $0x10] sm:$0xff]
    %v50 = vld [vmem:[%s1 + $0x18] sm:$0xff]
    %v51 = vpack.c.bf16 %v48, %v47
    %v52 = vpack.c.bf16 %v50, %v49
    %v53 = vld [vmem:[%s2] sm:$0xff]
    %v54 = vld [vmem:[%s2 + $0x8] sm:$0xff]
    %v55 = vld [vmem:[%s2 + $0x10] sm:$0xff]
    %v56 = vld [vmem:[%s2 + $0x18] sm:$0xff]
    %58 = vset.pattern.permute.xlu0 0
    %59 = vperm.xlu0 %58, %v53
    %v60 = vpop.permute.xlu0 %59
    %63 = vset.pattern.permute.xlu0 0
    %64 = vperm.xlu0 %63, %v54
    %v65 = vpop.permute.xlu0 %64
    %68 = vset.pattern.permute.xlu0 0
    %69 = vperm.xlu0 %68, %v55
    %v70 = vpop.permute.xlu0 %69
    %73 = vset.pattern.permute.xlu0 0
    %74 = vperm.xlu0 %73, %v56
    %v75 = vpop.permute.xlu0 %74
    %vm77 = vcmask 130048
    %v79 = vsel %vm77, %v51, 0
    %v82 = vsel %vm77, %v52, 0
    %v85 = vsel %vm77, %v39, 0
    %v88 = vsel %vm77, %v40, 0
    %v91 = vsel %vm77, %v41, 0
    %v94 = vsel %vm77, %v42, 0
    %v97 = vsel %vm77, %v43, 0
    %v100 = vsel %vm77, %v44, 0
    %v103 = vsel %vm77, %v45, 0
    %v106 = vsel %vm77, %v46, 0
    %108 = vmatprep.subr.bf16.mxu0 0
    %109 = vmatpush1.bf16.xpose.msra.mxu0 %v106
    %110 = vmatprep.subr.bf16.mxu0 0
    %111 = vmatpush1.bf16.xpose.msra.mxu0 %v103
    %112 = vmatprep.subr.bf16.mxu0 0
    %113 = vmatpush1.bf16.xpose.msra.mxu0 %v100
    %114 = vmatprep.subr.bf16.mxu0 0
    %115 = vmatpush1.bf16.xpose.msra.mxu0 %v97
    %116 = vmatprep.subr.bf16.mxu0 0
    %117 = vmatpush1.bf16.xpose.msra.mxu0 %v94
    %118 = vmatprep.subr.bf16.mxu0 0
    %119 = vmatpush1.bf16.xpose.msra.mxu0 %v91
    %120 = vmatprep.subr.bf16.mxu0 0
    %121 = vmatpush1.bf16.xpose.msra.mxu0 %v88
    %122 = vmatprep.subr.bf16.mxu0 0
    %123 = vmatpush1.bf16.xpose.msra.mxu0 %v85
    %124 = vmatprep.subr.bf16.mxu0 0
    %125 = vmatpush2.bf16.xpose.msra.mxu0 0
    %126 = vmatprep.subr.bf16.mxu0 0
    %127 = vmatpush2.bf16.xpose.msra.mxu0 0
    %128 = vmatprep.subr.bf16.mxu0 0
    %129 = vmatpush2.bf16.xpose.msra.mxu0 0
    %130 = vmatprep.subr.bf16.mxu0 0
    %131 = vmatpush2.bf16.xpose.msra.mxu0 0
    %132 = vmatprep.subr.bf16.mxu0 0
    %133 = vmatpush2.bf16.xpose.msra.mxu0 0
    %134 = vmatprep.subr.bf16.mxu0 0
    %135 = vmatpush2.bf16.xpose.msra.mxu0 0
    %136 = vmatprep.subr.bf16.mxu0 0
    %137 = vmatpush2.bf16.xpose.msra.mxu0 0
    %138 = vmatprep.subr.bf16.mxu0 0
    %139 = vmatpush2.bf16.xpose.msra.mxu0 0
    %140 = vmatprep.mubr.bf16.mxu0 0
    %141 = vmatmul.mubr.bf16.gmra.mxu0 %v79
    %v142 = vpop.f32.mrf.mxu0
    %v143 = vadd.f32 %v60, %v142
    %v144 = vpop.f32.mrf.mxu0
    %v145 = vpop.f32.mrf.mxu0
    %v146 = vadd.f32 %v65, %v145
    %v147 = vpop.f32.mrf.mxu0
    %148 = vmatprep.mubr.bf16.mxu0 0
    %149 = vmatmul.mubr.bf16.gmra.mxu0 %v82
    %v150 = vpop.f32.mrf.mxu0
    %v151 = vadd.f32 %v70, %v150
    %v152 = vpop.f32.mrf.mxu0
    %v153 = vpop.f32.mrf.mxu0
    %v154 = vadd.f32 %v75, %v153
    %v155 = vpop.f32.mrf.mxu0
    %156 = vdwg.mxu0
    %v157 = vmax.f32 %v143, 0.0
    %v158 = vmax.f32 %v146, 0.0
    %v159 = vmax.f32 %v151, 0.0
    %v160 = vmax.f32 %v154, 0.0
    %v161 = vld [vmem:[%s3] sm:$0xff]
    %v162 = vld [vmem:[%s3 + $0x8] sm:$0xff]
    %v163 = vld [vmem:[%s3 + $0x10] sm:$0xff]
    %v164 = vld [vmem:[%s3 + $0x18] sm:$0xff]
    %166 = vset.pattern.permute.xlu0 0
    %167 = vperm.xlu0 %166, %v161
    %v168 = vpop.permute.xlu0 %167
    %171 = vset.pattern.permute.xlu0 0
    %172 = vperm.xlu0 %171, %v162
    %v173 = vpop.permute.xlu0 %172
    %176 = vset.pattern.permute.xlu0 0
    %177 = vperm.xlu0 %176, %v163
    %v178 = vpop.permute.xlu0 %177
    %181 = vset.pattern.permute.xlu0 0
    %182 = vperm.xlu0 %181, %v164
    %v183 = vpop.permute.xlu0 %182
    %v185 = vmul.f32 %v157, %v168
    %v186 = vmul.f32 %v158, %v173
    %v187 = vmul.f32 %v159, %v178
    %v188 = vmul.f32 %v160, %v183
    %v189 = vadd.f32 %v185, %v186
    %v190 = vadd.f32 %v189, %v187
    %v191 = vadd.f32 %v190, %v188
    %v192 = vrot.slane %v191, 4
    %v193 = vadd.f32 %v191, %v192
    %v194 = vrot.slane %v193, 2
    %v195 = vadd.f32 %v193, %v194
    %v196 = vrot.slane %v195, 1
    %v197 = vadd.f32 %v195, %v196
    %s198 = sld [smem:[#allocation2]]
    %v199 = vstv %s198
    %v200 = vadd.f32 %v197, %v199
    %v201 = vsub.f32 0.0, %v200
    %v202 = vmul.f32 %v201, 1.442695
    %v203 = vpow.pop %v202
    %v204 = vadd.f32 %v203, 1.0
    %v205 = vrcp.pop %v204
    %v206 = vmul.f32 1.0, %v205
    %207 = vst [vmem:[#allocation3] sm:$0x1] %v206
    // Predicated region
    $region22: #{tpu_custom_call.1} parent=1 // pred_check
      _
    $region23: #{tpu_custom_call.1} parent=1 // pred_check_branch
      %209 = sbr.rel (0) target = $region25
    $region24: #{tpu_custom_call.1} parent=1 // pred_region
      %s211 = ssub.s32 16, 16
      %212 = vsyncadd [#allocation4], %s211
      %s214 = sshll.u32 [#allocation3], 4
      %s215 = int_to_ptr.vmem [resolvable:$true] %s214
      %217 = dma.vmem_to_hbm [thread:$0]  %s215, 16, %s5, [#allocation4]
    $region25: #{tpu_custom_call.1} parent=1 // pred_fallthru
      _
    // Predicated region
    $region26: #{tpu_custom_call.1} parent=1 // pred_check
      _
    $region27: #{tpu_custom_call.1} parent=1 // pred_check_branch
      %219 = sbr.rel (0) target = $region29
    $region28: #{tpu_custom_call.1} parent=1 // pred_region
      %220 = dma.done [#allocation4], 16
    $region29: #{tpu_custom_call.1} parent=1 // pred_fallthru
      _
    %221 = vsyncpa [#allocation4], 1

</llo_original>
